<compile_context>
chip_gen: v5e
topology: v5e:2x2
jax: 0.10.0
libtpu: 0.0.40
codegen_flags: <defaults>
</compile_context>

<pallas_src>
import functools

import jax
import jax.numpy as jnp
from jax import lax
from jax.experimental import pallas as pl
from jax.experimental.pallas import tpu as pltpu


# -----------------------------------------------------------------------------
# Pallas kernel: LayerNorm(no affine) -> Linear(no bias) -> + (pos + folded b)
# -----------------------------------------------------------------------------
def _linear_embed_kernel(x_ref, w_ref, pos_ref, o_ref, *, eps):
    # x_ref:   (bt, pt, F)   patch rows for bt batch elements / pt patches
    # w_ref:   (F, D)        gamma-folded weight
    # pos_ref: (pt, D)       positional embedding + folded bias (shared over bt)
    # o_ref:   (bt, pt, D)
    bt, pt, nf = x_ref.shape
    x = x_ref[...].reshape(bt * pt, nf).astype(jnp.float32)

    # LayerNorm over features: biased variance, eps inside rsqrt (torch).
    # Affine (gamma/beta) is folded into w/pos in the wrapper.
    mean = jnp.mean(x, axis=-1, keepdims=True)
    xc = x - mean
    var = jnp.mean(xc * xc, axis=-1, keepdims=True)
    xn = xc * lax.rsqrt(var + eps)

    # Single MXU matmul for the whole tile, f32 accumulation.
    y = jnp.dot(xn, w_ref[...].astype(jnp.float32),
                preferred_element_type=jnp.float32)          # (bt*pt, D)

    # + positional embedding (+ folded linear bias): (pt, D) broadcasts over bt.
    y = y.reshape(bt, pt, -1) + pos_ref[...]

    # Dropout(p=0.0) is the identity.
    o_ref[...] = y.astype(o_ref.dtype)


def linear_embedding_forward(x, params, *, patch_size, eps=1e-5,
                             block_bytes=4 << 20, hbm_dtype=None,
                             vmem_limit_bytes=None):
    """x: [B, C, H, W] float32 -> [B, n_patches, out_dim] float32."""
    B, C, H, W = x.shape
    p1, p2 = patch_size
    Hp, Wp = H // p1, W // p2
    P = Hp * Wp                       # n_patches
    F = p1 * p2 * C                   # n_features
    D = params["w"].shape[1]          # out_dim

    # --- fold LayerNorm affine + linear bias into weight / pos (done once,
    # in f32, in the wrapper: W' = gamma*W ; pos' = pos + beta@W + b).
    gamma = params["gamma"].reshape(F).astype(jnp.float32)
    beta = params["beta"].reshape(F).astype(jnp.float32)
    w = params["w"].astype(jnp.float32)
    b = params["b"].reshape(D).astype(jnp.float32)
    pos = params["pos"].reshape(P, D).astype(jnp.float32)
    w_f = gamma[:, None] * w                                   # (F, D)
    pos_f = pos + (beta @ w + b)[None, :]                      # (P, D)

    # --- patchify: 'b c (h x) (w y) -> b (h w) (x y c)'.  Pure layout; XLA is
    # allowed to fuse it into the pallas_call operand (allow_input_fusion).
    xr = x.reshape(B, C, Hp, p1, Wp, p2)
    xr = jnp.transpose(xr, (0, 2, 4, 3, 5, 1)).reshape(B, P, F)
    if hbm_dtype is not None:
        # e.g. bf16 on v6e/v7x to halve activation HBM bytes; in-kernel math
        # stays f32 (v5e has no bf16 VPU/EUP).
        xr = xr.astype(hbm_dtype)
    itemsize = jnp.dtype(xr.dtype).itemsize

    # --- tile sizing: size by bytes (mem-bound kernel -> big tiles), then make
    # sure the grid has >= 2 steps so v7x's 2 TensorCores both get work.
    target_rows = max(8, block_bytes // (F * itemsize))
    if P <= target_rows:
        pt = P
    else:
        pt, cand = 8, 16
        while cand <= min(P, target_rows):
            if P % cand == 0:
                pt = cand
            cand += 8
    bt = max(1, min(B, target_rows // pt))
    while B % bt:
        bt -= 1
    if (B // bt) * (P // pt) < 2:                 # megacore: want >= 2 steps
        if B > 1:
            bt = max(1, bt // 2)
            while B % bt:
                bt -= 1
        elif pt % 16 == 0:                         # B == 1: split the patch axis
            pt //= 2
    num_b, num_p = B // bt, P // pt

    # --- VMEM budget: only raise the scoped limit if the double-buffered
    # blocks would not fit the most conservative default (v5e ~16 MiB);
    # cap at 64 MiB so the request is valid on v7x too.
    if vmem_limit_bytes is None:
        in_block = bt * pt * F * itemsize
        out_block = bt * pt * D * jnp.dtype(x.dtype).itemsize
        needed = 2 * (in_block + out_block) + 4 * (F * D + P * D) + (2 << 20)
        if needed > (16 << 20):
            vmem_limit_bytes = min(needed, 64 << 20)

    kernel = functools.partial(_linear_embed_kernel, eps=eps)

    out = pl.pallas_call(
        kernel,
        out_shape=jax.ShapeDtypeStruct((B, P, D), x.dtype),
        grid_spec=pltpu.PrefetchScalarGridSpec(
            num_scalar_prefetch=0,
            grid=(num_b, num_p),
            in_specs=[
                pl.BlockSpec((bt, pt, F), lambda i, j: (i, j, 0)),
                pl.BlockSpec((F, D), lambda i, j: (0, 0)),
                pl.BlockSpec((pt, D), lambda i, j: (j, 0)),
            ],
            out_specs=pl.BlockSpec((bt, pt, D), lambda i, j: (i, j, 0)),
        ),
        compiler_params=pltpu.CompilerParams(
            dimension_semantics=("parallel", "parallel"),
            allow_input_fusion=[True, False, False],
            vmem_limit_bytes=vmem_limit_bytes,
        ),
    )(xr, w_f, pos_f)

    return out


# -----------------------------------------------------------------------------
# Pure-JAX reference (matches the PyTorch forward semantics, unfolded params)
# -----------------------------------------------------------------------------
def reference_forward(x, params, *, patch_size, eps=1e-5):
    B, C, H, W = x.shape
    p1, p2 = patch_size
    Hp, Wp = H // p1, W // p2
    xr = x.reshape(B, C, Hp, p1, Wp, p2)
    xr = jnp.transpose(xr, (0, 2, 4, 3, 5, 1)).reshape(B, Hp * Wp, p1 * p2 * C)
    mean = jnp.mean(xr, axis=-1, keepdims=True)
    var = jnp.mean((xr - mean) ** 2, axis=-1, keepdims=True)
    xn = (xr - mean) * lax.rsqrt(var + eps) * params["gamma"] + params["beta"]
    y = jnp.einsum("bpf,fd->bpd", xn, params["w"]) + params["b"]
    return y + params["pos"]


if __name__ == "__main__":
    # Small shapes consistent with the module.
    B, C, H, W = 2, 4, 16, 16
    patch_size = (4, 4)
    p1, p2 = patch_size
    n_patches = (H // p1) * (W // p2)       # 16
    n_features = p1 * p2 * C                # 64
    out_dim = 32

    key = jax.random.PRNGKey(0)
    kx, kw, kb, kp = jax.random.split(key, 4)

    x = jax.random.normal(kx, (B, C, H, W), dtype=jnp.float32)

    # Deterministic parameter init (shapes per LinearEmbedding.__init__):
    #   LayerNorm(n_features): gamma=ones, beta=zeros (torch defaults)
    #   Linear(n_features, out_dim): small uniform weights + bias
    #   positional_embedding: trunc-normal std=0.02, shape [1, n_patches, out_dim]
    bound = 1.0 / (n_features ** 0.5)
    params = {
        "gamma": jnp.ones((1, n_features), jnp.float32),
        "beta": jnp.zeros((1, n_features), jnp.float32),
        "w": jax.random.uniform(kw, (n_features, out_dim), jnp.float32,
                                -bound, bound),
        "b": jax.random.uniform(kb, (1, out_dim), jnp.float32, -bound, bound),
        "pos": 0.02 * jax.random.truncated_normal(
            kp, -2.0, 2.0, (1, n_patches, out_dim), jnp.float32),
    }
    # TODO(synk): dropout (p=0.0 here) and optional class token / registers
    # (disabled in this config) are identity / concat glue and not implemented
    # as separate kernels.

    out = linear_embedding_forward(x, params, patch_size=patch_size)
    out = jax.block_until_ready(out)

    ref = reference_forward(x, params, patch_size=patch_size)
    assert out.shape == (B, n_patches, out_dim)
    assert jnp.allclose(out, ref, atol=1e-5, rtol=1e-5)

    print("KERNEL_OK")
</pallas_src>

<mosaic_0001>
module attributes {stable_mosaic.version = 11 : i64} {
  func.func @_linear_embed_kernel(%arg0: i32, %arg1: i32, %arg2: memref<1x16x64xf32, #tpu.memory_space<vmem>>, %arg3: memref<64x32xf32, #tpu.memory_space<vmem>>, %arg4: memref<16x32xf32, #tpu.memory_space<vmem>>, %arg5: memref<1x16x32xf32, #tpu.memory_space<vmem>>) attributes {dimension_semantics = [#tpu.dimension_semantics<parallel>, #tpu.dimension_semantics<parallel>], iteration_bounds = array<i64: 2, 1>, scalar_prefetch = 0 : i64, scratch_operands = 0 : i64, tpu.core_type = #tpu.core_type<tc>, window_params = [{transform_indices = @transform_0, window_bounds = array<i64: 1, 16, 64>}, {pipeline_mode = #tpu.pipeline_mode<synchronous>, transform_indices = @transform_1, window_bounds = array<i64: 64, 32>}, {transform_indices = @transform_2, window_bounds = array<i64: 16, 32>}, {transform_indices = @transform_3, window_bounds = array<i64: 1, 16, 32>}]} {
    %c0 = arith.constant 0 : index
    %c0_0 = arith.constant 0 : index
    %c0_1 = arith.constant 0 : index
    %0 = vector.load %arg2[%c0, %c0_0, %c0_1] : memref<1x16x64xf32, #tpu.memory_space<vmem>>, vector<1x16x64xf32>
    %1 = vector.shape_cast %0 : vector<1x16x64xf32> to vector<16x64xf32>
    %cst = arith.constant dense<0.000000e+00> : vector<16xf32>
    %2 = vector.multi_reduction <add>, %1, %cst [1] : vector<16x64xf32> to vector<16xf32>
    %3 = vector.shape_cast %2 : vector<16xf32> to vector<16x1xf32>
    %cst_2 = arith.constant 6.400000e+01 : f32
    %4 = vector.broadcast %cst_2 : f32 to vector<16x1xf32>
    %5 = arith.divf %3, %4 : vector<16x1xf32>
    %6 = vector.broadcast %5 : vector<16x1xf32> to vector<16x64xf32>
    %7 = arith.subf %1, %6 : vector<16x64xf32>
    %8 = arith.mulf %7, %7 : vector<16x64xf32>
    %cst_3 = arith.constant dense<0.000000e+00> : vector<16xf32>
    %9 = vector.multi_reduction <add>, %8, %cst_3 [1] : vector<16x64xf32> to vector<16xf32>
    %10 = vector.shape_cast %9 : vector<16xf32> to vector<16x1xf32>
    %cst_4 = arith.constant 6.400000e+01 : f32
    %11 = vector.broadcast %cst_4 : f32 to vector<16x1xf32>
    %12 = arith.divf %10, %11 : vector<16x1xf32>
    %cst_5 = arith.constant 9.99999974E-6 : f32
    %13 = vector.broadcast %cst_5 : f32 to vector<16x1xf32>
    %14 = arith.addf %12, %13 : vector<16x1xf32>
    %15 = math.rsqrt %14 : vector<16x1xf32>
    %16 = vector.broadcast %15 : vector<16x1xf32> to vector<16x64xf32>
    %17 = arith.mulf %7, %16 : vector<16x64xf32>
    %c0_6 = arith.constant 0 : index
    %c0_7 = arith.constant 0 : index
    %18 = vector.load %arg3[%c0_6, %c0_7] : memref<64x32xf32, #tpu.memory_space<vmem>>, vector<64x32xf32>
    %cst_8 = arith.constant dense<0.000000e+00> : vector<16x32xf32>
    %19 = tpu.matmul %17, %18, %cst_8 {dimension_numbers = #tpu.dot_dimension_numbers<[1], [0], [0], [1], [0, 0, 1, 1], [], []>} : vector<16x64xf32>, vector<64x32xf32>, vector<16x32xf32> -> vector<16x32xf32>
    %20 = vector.shape_cast %19 : vector<16x32xf32> to vector<1x16x32xf32>
    %c0_9 = arith.constant 0 : index
    %c0_10 = arith.constant 0 : index
    %21 = vector.load %arg4[%c0_9, %c0_10] : memref<16x32xf32, #tpu.memory_space<vmem>>, vector<16x32xf32>
    %22 = vector.shape_cast %21 : vector<16x32xf32> to vector<1x16x32xf32>
    %23 = arith.addf %20, %22 : vector<1x16x32xf32>
    %c0_11 = arith.constant 0 : index
    %c0_12 = arith.constant 0 : index
    %c0_13 = arith.constant 0 : index
    %24 = vector.load %arg5[%c0_11, %c0_12, %c0_13] : memref<1x16x32xf32, #tpu.memory_space<vmem>>, vector<1x16x32xf32>
    tpu.vector_store %arg5[%c0_11, %c0_12, %c0_13], %23 {strides = array<i32>} : memref<1x16x32xf32, #tpu.memory_space<vmem>>, vector<1x16x32xf32>,
    return
  }
  func.func @transform_0(%arg0: i32, %arg1: i32) -> (i32, i32, i32) {
    %c0_i32 = arith.constant 0 : i32
    %c0_i32_0 = arith.constant 0 : i32
    return %arg0, %arg1, %c0_i32 : i32, i32, i32
  }
  func.func @transform_1(%arg0: i32, %arg1: i32) -> (i32, i32) {
    %c0_i32 = arith.constant 0 : i32
    %c0_i32_0 = arith.constant 0 : i32
    %c0_i32_1 = arith.constant 0 : i32
    return %c0_i32, %c0_i32_0 : i32, i32
  }
  func.func @transform_2(%arg0: i32, %arg1: i32) -> (i32, i32) {
    %c0_i32 = arith.constant 0 : i32
    %c0_i32_0 = arith.constant 0 : i32
    return %arg1, %c0_i32 : i32, i32
  }
  func.func @transform_3(%arg0: i32, %arg1: i32) -> (i32, i32, i32) {
    %c0_i32 = arith.constant 0 : i32
    %c0_i32_0 = arith.constant 0 : i32
    return %arg0, %arg1, %c0_i32 : i32, i32, i32
  }
}

</mosaic_0001>

<llo_original>
// kernel: tpu_custom_call.1
$region0: #{tpu_custom_call.1}
  #allocation0 [shape = 'u32[]', space=smem, size = 0x4, offset = 0x4, fixed_abs, tag = 'smem constant byte address 0x4 - core index']
  #allocation1 [shape = 'u32[72,128]{1,0:T(1,128)}', space=vmem, size = 0x9000, scoped, tag = 'internal scratch']
  %s0 = inlined_call_operand.vmem [shape: f32[2,16,64], index: 0, kind: input, shape index: {}]
  %s1 = inlined_call_operand.vmem [shape: f32[64,32], index: 1, kind: input, shape index: {}]
  %s2 = inlined_call_operand.vmem [shape: f32[16,32], index: 2, kind: input, shape index: {}]
  %s3 = inlined_call_operand.hbm [shape: f32[2,16,32], index: 3, kind: output, shape index: {}]
  %s4 = sld [smem:[#allocation0]]
  $region45: #{tpu_custom_call.1} parent=0
    _
  %s6 = ssub.s32 1, %s4
  %s7 = scalar_select 0, %s6, %s4
  $region1: #{tpu_custom_call.1} parent=0
    #allocation2 [shape = 'u8[16384]{0}', space=vmem, size = 0x4000, scoped, tag = 'output window, operand 0']
    #allocation3 [shape = 's32[2]{0}', space=sflag, size = 0x8, scoped, tag = 'scoped memory for tpu_custom_call.1']
    %8 = vsyncpa [#allocation3], 0
    %s9 = scalar_lea.sflag [#allocation3], 1
    %10 = vsyncpa %s9, 0
    loop: start=0, step=1, limit=4
    $region2: #{tpu_custom_call.1} parent=1 // loop_pre_header
      _
    $region3: #{tpu_custom_call.1} parent=1 // loop_header
      %s12 = sphi 0, %s16
      %p13 = scmp.ge.s32.totalorder %s12, 4
      %s19 = sphi 0, %s31
      %s20 = sphi 0, %s27
      %s21 = sphi 0, %s19
      %s22 = sphi 0, %s20
      %s23 = sphi 0, %s21
      %s24 = sphi 0, %s22
      %s36 = sphi 0, %s38
      %s39 = sphi 0, %s36
      %s40 = sphi 0, %s39
      %s56 = sphi 0, %s40
      %s60 = sphi 0, %s60
      %s62 = sphi 0, %s60
      %s63 = sphi 0, %s62
      %s77 = sphi 0, %s63
      %s83 = sphi 0, %s85
      %s86 = sphi 0, %s83
      %s87 = sphi 0, %s86
      %s103 = sphi 0, %s87
      %s111 = sphi 0, %s113
      %s114 = sphi 0, %s111
      %s115 = sphi 0, %s114
      %s131 = sphi 0, %s115
    $region4: #{tpu_custom_call.1} parent=1 // loop_header_branch
      %15 = sbr.rel (%p13) target = $region8
    $region5: #{tpu_custom_call.1} parent=1 // loop_body
      %s17 = ssub.s32 %s12, 1
      %s18 = ssub.s32 %s12, 2
      %s25 = sadd.s32 1, %s20
      %p26 = scmp.ge.s32.totalorder %s25, 1
      %s27 = scalar_select %p26, 0, %s25
      %s28 = sadd.s32 1, %s19
      %s29 = scalar_select %p26, %s28, %s19
      %p30 = scmp.ge.s32.totalorder %s29, 2
      %s31 = scalar_select %p30, 0, %s29
      %s32 = ssub.s32 %s19, %s31
      %s33 = ssub.s32 %s20, %s27
      %s34 = sor.u32 %s32, %s33
      %p35 = scmp.eq.s32.totalorder %s34, 0
      %s37 = sadd.s32 %s36, 1
      %s38 = scalar_select %p35, %s36, %s37
      %p41 = pneg %p35
      %p42 = scmp.eq.s32.totalorder %s12, 1
      %p43 = por %p41, %p42
      %p44 = scmp.ne.s32.totalorder %s36, %s39
      %p45 = scmp.eq.s32.totalorder %s12, 0
      %p46 = por %p44, %p45
      %p47 = scmp.ne.s32.totalorder %s36, %s39
      %p48 = scmp.eq.s32.totalorder %s17, 1
      %p49 = por %p47, %p48
      %p50 = scmp.ne.s32.totalorder %s39, %s40
      %p51 = scmp.eq.s32.totalorder %s17, 0
      %p52 = por %p50, %p51
      %p53 = scmp.ne.s32.totalorder %s39, %s40
      %p54 = scmp.eq.s32.totalorder %s18, 1
      %p55 = por %p53, %p54
      %p57 = scmp.ne.s32.totalorder %s40, %s56
      %p58 = scmp.eq.s32.totalorder %s18, 0
      %p59 = por %p57, %p58
      %s61 = sadd.s32 %s60, 1
      %p64 = scmp.eq.s32.totalorder %s12, 1
      %p65 = scmp.ne.s32.totalorder %s60, %s62
      %p66 = scmp.eq.s32.totalorder %s12, 0
      %p67 = por %p65, %p66
      %p68 = scmp.ne.s32.totalorder %s60, %s62
      %p69 = scmp.eq.s32.totalorder %s17, 1
      %p70 = por %p68, %p69
      %p71 = scmp.ne.s32.totalorder %s62, %s63
      %p72 = scmp.eq.s32.totalorder %s17, 0
      %p73 = por %p71, %p72
      %p74 = scmp.ne.s32.totalorder %s62, %s63
      %p75 = scmp.eq.s32.totalorder %s18, 1
      %p76 = por %p74, %p75
      %p78 = scmp.ne.s32.totalorder %s63, %s77
      %p79 = scmp.eq.s32.totalorder %s18, 0
      %p80 = por %p78, %p79
      %s81 = ssub.s32 %s20, %s27
      %p82 = scmp.eq.s32.totalorder %s81, 0
      %s84 = sadd.s32 %s83, 1
      %s85 = scalar_select %p82, %s83, %s84
      %p88 = pneg %p82
      %p89 = scmp.eq.s32.totalorder %s12, 1
      %p90 = por %p88, %p89
      %p91 = scmp.ne.s32.totalorder %s83, %s86
      %p92 = scmp.eq.s32.totalorder %s12, 0
      %p93 = por %p91, %p92
      %p94 = scmp.ne.s32.totalorder %s83, %s86
      %p95 = scmp.eq.s32.totalorder %s17, 1
      %p96 = por %p94, %p95
      %p97 = scmp.ne.s32.totalorder %s86, %s87
      %p98 = scmp.eq.s32.totalorder %s17, 0
      %p99 = por %p97, %p98
      %p100 = scmp.ne.s32.totalorder %s86, %s87
      %p101 = scmp.eq.s32.totalorder %s18, 1
      %p102 = por %p100, %p101
      %p104 = scmp.ne.s32.totalorder %s87, %s103
      %p105 = scmp.eq.s32.totalorder %s18, 0
      %p106 = por %p104, %p105
      %s107 = ssub.s32 %s19, %s31
      %s108 = ssub.s32 %s20, %s27
      %s109 = sor.u32 %s107, %s108
      %p110 = scmp.eq.s32.totalorder %s109, 0
      %s112 = sadd.s32 %s111, 1
      %s113 = scalar_select %p110, %s111, %s112
      %p116 = pneg %p110
      %p117 = scmp.eq.s32.totalorder %s12, 1
      %p118 = por %p116, %p117
      %p119 = scmp.ne.s32.totalorder %s111, %s114
      %p120 = scmp.eq.s32.totalorder %s12, 0
      %p121 = por %p119, %p120
      %p122 = scmp.ne.s32.totalorder %s111, %s114
      %p123 = scmp.eq.s32.totalorder %s17, 1
      %p124 = por %p122, %p123
      %p125 = scmp.ne.s32.totalorder %s114, %s115
      %p126 = scmp.eq.s32.totalorder %s17, 0
      %p127 = por %p125, %p126
      %p128 = scmp.ne.s32.totalorder %s114, %s115
      %p129 = scmp.eq.s32.totalorder %s18, 1
      %p130 = por %p128, %p129
      %p132 = scmp.ne.s32.totalorder %s115, %s131
      %p133 = scmp.eq.s32.totalorder %s18, 0
      %p134 = por %p132, %p133
      %p135 = scmp.le.s32.totalorder 1, %s12
      %p136 = scmp.lt.s32.totalorder %s12, 3
      %p137 = pnand %p135, %p136
      %p138 = pneg %p137
      // Predicated region
      $region9: #{tpu_custom_call.1} parent=5 // pred_check
        _
      $region10: #{tpu_custom_call.1} parent=5 // pred_check_branch
        %140 = sbr.rel (%p137) target = $region12
      $region11: #{tpu_custom_call.1} parent=5 // pred_region
        %s141 = ssub.s32 %s12, 1
        // Predicated region
        $region13: #{tpu_custom_call.1} parent=11 // pred_check
          %p142 = pneg %p73
        $region14: #{tpu_custom_call.1} parent=11 // pred_check_branch
          %144 = sbr.rel (%p142) target = $region16
        $region15: #{tpu_custom_call.1} parent=11 // pred_region
          _
        $region16: #{tpu_custom_call.1} parent=11 // pred_fallthru
          _
        // Predicated region
        $region17: #{tpu_custom_call.1} parent=11 // pred_check
          %p145 = pneg %p99
        $region18: #{tpu_custom_call.1} parent=11 // pred_check_branch
          %147 = sbr.rel (%p145) target = $region20
        $region19: #{tpu_custom_call.1} parent=11 // pred_region
          %s148 = smul.u32 2, %s22
          %p149 = scmp.lt.s32.totalorder %s148, 1
          %s150 = scalar_select %p149, %s148, 1
          %s151 = smul.addr %s150, 8
          %s152 = scalar_lea.vmem %s2, %s151
          %s153 = smul.u32 2, %s22
        $region20: #{tpu_custom_call.1} parent=11 // pred_fallthru
          _
      $region12: #{tpu_custom_call.1} parent=5 // pred_fallthru
        _
      %p154 = scmp.lt.s32.totalorder %s12, 2
      // Predicated region
      $region21: #{tpu_custom_call.1} parent=5 // pred_check
        %p155 = pneg %p154
      $region22: #{tpu_custom_call.1} parent=5 // pred_check_branch
        %157 = sbr.rel (%p155) target = $region24
      $region23: #{tpu_custom_call.1} parent=5 // pred_region
        // Predicated region
        $region25: #{tpu_custom_call.1} parent=23 // pred_check
          %p158 = pneg %p46
        $region26: #{tpu_custom_call.1} parent=23 // pred_check_branch
          %160 = sbr.rel (%p158) target = $region28
        $region27: #{tpu_custom_call.1} parent=23 // pred_region
          %s161 = smul.u32 2, %s20
          %p162 = scmp.lt.s32.totalorder %s19, 1
          %s163 = scalar_select %p162, %s19, 1
          %p164 = scmp.lt.s32.totalorder %s161, 1
          %s165 = scalar_select %p164, %s161, 1
          %s166 = smul.addr %s163, 2
          %s167 = sadd.s32 %s165, %s166
          %s168 = smul.addr %s167, 8
          %s169 = scalar_lea.vmem %s0, %s168
          %s170 = smul.u32 2, %s20
        $region28: #{tpu_custom_call.1} parent=23 // pred_fallthru
          _
      $region24: #{tpu_custom_call.1} parent=5 // pred_fallthru
        _
      %p171 = scmp.le.s32.totalorder 1, %s12
      %p172 = scmp.lt.s32.totalorder %s12, 3
      %p173 = pnand %p171, %p172
      %p174 = pneg %p173
      // Predicated region
      $region29: #{tpu_custom_call.1} parent=5 // pred_check
        _
      $region30: #{tpu_custom_call.1} parent=5 // pred_check_branch
        %176 = sbr.rel (%p173) target = $region32
      $region31: #{tpu_custom_call.1} parent=5 // pred_region
        %s177 = ssub.s32 %s12, 1
        %s178 = smul.u32 2, %s22
        %p179 = scmp.lt.s32.totalorder %s21, 1
        %s180 = scalar_select %p179, %s21, 1
        %p181 = scmp.lt.s32.totalorder %s178, 1
        %s182 = scalar_select %p181, %s178, 1
        %s183 = smul.addr %s180, 2
        %s184 = sadd.s32 %s182, %s183
        %s185 = smul.addr %s184, 8
        %s186 = scalar_lea.vmem %s0, %s185
        %p187 = pneg %p52
        %p188 = pneg %p49
        %p189 = pneg %p73
        %p190 = pneg %p70
        %s191 = smul.u32 2, %s22
        %p192 = scmp.lt.s32.totalorder %s191, 1
        %s193 = scalar_select %p192, %s191, 1
        %s194 = smul.addr %s193, 8
        %s195 = scalar_lea.vmem %s2, %s194
        %p196 = pneg %p99
        %p197 = pneg %p96
        %p198 = pneg %p127
        %p199 = pneg %p124
        %s200 = sand.u32 %s114, 1
        %s201 = scalar_lea.sflag [#allocation3], %s200
        %s202 = sand.u32 %s114, 1
        %s203 = smul.addr %s202, 16
        %s204 = scalar_lea.vmem [#allocation2], %s203
        %s205 = smul.u32 2, %s22
        %p206 = scmp.lt.s32.totalorder %s21, 1
        %s207 = scalar_select %p206, %s21, 1
        %p208 = scmp.lt.s32.totalorder %s205, 1
        %s209 = scalar_select %p208, %s205, 1
        %s210 = smul.addr %s207, 2
        %s211 = sadd.s32 %s209, %s210
        %s212 = smul.addr %s211, 8
        %s213 = scalar_lea.vmem %s0, %s212
        %s214 = smul.u32 2, %s22
        %s215 = smul.u32 2, %s22
        %p216 = scmp.lt.s32.totalorder %s215, 1
        %s217 = scalar_select %p216, %s215, 1
        %s218 = smul.addr %s217, 8
        %s219 = scalar_lea.vmem %s2, %s218
        %s220 = smul.u32 2, %s22
        %s221 = smul.u32 2, %s22
        %v222 = vld [vmem:[%s213] sm:$0xff]
        %v223 = vld [vmem:[%s213 + $0x8] sm:$0xff]
        %vm224 = vcmask 523264
        %v225 = vsel %vm224, %v222, 0.0
        %226 = vadd.xlane.f32.xlu0 %v225
        %v227 = vpop.xlane.xlu0 %226
        %v228 = vsel %vm224, %v223, 0.0
        %229 = vadd.xlane.f32.xlu0 %v228
        %v230 = vpop.xlane.xlu0 %229
        %v231 = vrcp.pop 64.0
        %v232 = vmul.f32 64.0, %v231
        %v233 = vsub.f32 1.0, %v232
        %v234 = vmul.f32 %v231, %v233
        %v235 = vadd.f32 %v231, %v234
        %vm236 = vweird.f32 %v231
        %v237 = vsel %vm236, %v231, %v235
        %v238 = vmul.f32 %v227, %v237
        %v239 = vmul.f32 %v230, %v237
        %v240 = vsub.f32 %v222, %v238
        %v241 = vsub.f32 %v223, %v239
        %v242 = vmul.f32 %v240, %v240
        %v243 = vmul.f32 %v241, %v241
        %v244 = vsel %vm224, %v242, 0.0
        %245 = vadd.xlane.f32.xlu0 %v244
        %v246 = vpop.xlane.xlu0 %245
        %v247 = vsel %vm224, %v243, 0.0
        %248 = vadd.xlane.f32.xlu0 %v247
        %v249 = vpop.xlane.xlu0 %248
        %v250 = vmul.f32 %v246, %v237
        %v251 = vmul.f32 %v249, %v237
        %v252 = vadd.f32 %v250, 1e-05
        %v253 = vadd.f32 %v251, 1e-05
        %v254 = vrsqrt.pop %v252
        %v255 = vmul.f32 %v254, %v252
        %v256 = vmul.f32 %v255, %v254
        %v257 = vmul.f32 0.5, %v256
        %v258 = vsub.f32 1.5, %v257
        %v259 = vmul.f32 %v254, %v258
        %vm260 = vweird.f32 %v252
        %vm261 = vweird.f32 %v254
        %vm262 = vmor %vm260, %vm261
        %v263 = vsel %vm262, %v254, %v259
        %v264 = vrsqrt.pop %v253
        %v265 = vmul.f32 %v264, %v253
        %v266 = vmul.f32 %v265, %v264
        %v267 = vmul.f32 0.5, %v266
        %v268 = vsub.f32 1.5, %v267
        %v269 = vmul.f32 %v264, %v268
        %vm270 = vweird.f32 %v253
        %vm271 = vweird.f32 %v264
        %vm272 = vmor %vm270, %vm271
        %v273 = vsel %vm272, %v264, %v269
        %v274 = vmul.f32 %v240, %v263
        %v275 = vmul.f32 %v241, %v273
        %v276 = vld [vmem:[%s1] sm:$0xff]
        %v277 = vld [vmem:[%s1 + $0x8] sm:$0xff]
        %v278 = vld [vmem:[%s1 + $0x10] sm:$0xff]
        %v279 = vld [vmem:[%s1 + $0x18] sm:$0xff]
        %v280 = vld [vmem:[%s1 + $0x20] sm:$0xff]
        %v281 = vld [vmem:[%s1 + $0x28] sm:$0xff]
        %v282 = vld [vmem:[%s1 + $0x30] sm:$0xff]
        %v283 = vld [vmem:[%s1 + $0x38] sm:$0xff]
        %v285 = vsel %vm224, %v274, 0
        %v288 = vsel %vm224, %v275, 0
        %290 = vmatpush.msra.mxu0 0.0
        %291 = vmatpush.msra.mxu0 0.0
        %292 = vmatpush.msra.mxu0 0.0
        %293 = vmatpush.msra.mxu0 0.0
        %294 = vmatpush.msra.mxu0 0.0
        %295 = vmatpush.msra.mxu0 0.0
        %296 = vmatpush.msra.mxu0 0.0
        %297 = vmatpush.msra.mxu0 0.0
        %298 = vmatpush.msra.mxu0 %v283
        %299 = vmatpush.msra.mxu0 %v282
        %300 = vmatpush.msra.mxu0 %v281
        %301 = vmatpush.msra.mxu0 %v280
        %302 = vmatpush.msra.mxu0 %v279
        %303 = vmatpush.msra.mxu0 %v278
        %304 = vmatpush.msra.mxu0 %v277
        %305 = vmatpush.msra.mxu0 %v276
        %306 = vmatmul.f32.gmra.mxu0 %v285
        %v307 = vpop.f32.mrf.mxu0
        %v308 = vadd.f32 0.0, %v307
        %309 = vmatmul.f32.gmra.mxu0 %v288
        %v310 = vpop.f32.mrf.mxu0
        %v311 = vadd.f32 0.0, %v310
        %312 = vdwg.mxu0
        %v313 = vld [vmem:[%s219] sm:$0xff]
        %v314 = vld [vmem:[%s219 + $0x8] sm:$0xff]
        %v315 = vadd.f32 %v308, %v313
        %v316 = vadd.f32 %v311, %v314
        %vm317 = vcmask 261120
        %318 = vst.msk [vmem:[%s204] sm:$0xff] %vm317, %v315
        %319 = vst.msk [vmem:[%s204 + $0x8] sm:$0xff] %vm317, %v316
        %s320 = sand.u32 %s114, 1
        %s321 = scalar_lea.sflag [#allocation3], %s320
        %s322 = sand.u32 %s114, 1
        %s323 = smul.addr %s322, 16
        %s324 = scalar_lea.vmem [#allocation2], %s323
        // Predicated region
        $region33: #{tpu_custom_call.1} parent=31 // pred_check
          %p325 = pneg %p124
        $region34: #{tpu_custom_call.1} parent=31 // pred_check_branch
          %327 = sbr.rel (%p325) target = $region36
        $region35: #{tpu_custom_call.1} parent=31 // pred_region
          %s328 = smul.u32 2, %s22
          %330 = vsyncadd %s321, 0
          %s331 = smul.addr %s21, 2
          %s332 = sadd.s32 %s328, %s331
          %s333 = smul.addr %s332, 8
          %s334 = scalar_lea.hbm %s3, %s333
          %s335 = sshll.u32 %s324, 4
          %s336 = int_to_ptr.vmem [resolvable:$true] %s335
          %s337 = sshll.u32 %s334, 4
          %s338 = int_to_ptr.hbm [resolvable:$true] %s337
          %343 = dma.vmem_to_hbm [thread:$0]  %s336, 256, %s338, %s321, 128, 128, 8
        $region36: #{tpu_custom_call.1} parent=31 // pred_fallthru
          _
      $region32: #{tpu_custom_call.1} parent=5 // pred_fallthru
        _
      %p344 = scmp.le.s32.totalorder 2, %s12
      // Predicated region
      $region37: #{tpu_custom_call.1} parent=5 // pred_check
        %p345 = pneg %p344
      $region38: #{tpu_custom_call.1} parent=5 // pred_check_branch
        %347 = sbr.rel (%p345) target = $region40
      $region39: #{tpu_custom_call.1} parent=5 // pred_region
        %s348 = ssub.s32 %s12, 2
        // Predicated region
        $region41: #{tpu_custom_call.1} parent=39 // pred_check
          %p349 = pneg %p130
        $region42: #{tpu_custom_call.1} parent=39 // pred_check_branch
          %351 = sbr.rel (%p349) target = $region44
        $region43: #{tpu_custom_call.1} parent=39 // pred_region
          %s352 = sand.u32 %s115, 1
          %s353 = scalar_lea.sflag [#allocation3], %s352
          %s354 = sand.u32 %s115, 1
          %s355 = smul.addr %s354, 16
          %s356 = scalar_lea.vmem [#allocation2], %s355
          %358 = dma.done %s353, 256
        $region44: #{tpu_custom_call.1} parent=39 // pred_fallthru
          _
      $region40: #{tpu_custom_call.1} parent=5 // pred_fallthru
        _
    $region6: #{tpu_custom_call.1} parent=1 // loop_footer
      %s16 = sadd.s32 1, %s12
    $region7: #{tpu_custom_call.1} parent=1 // loop_footer_branch
      %11 = sbr.rel target = $region3
    $region8: #{tpu_custom_call.1} parent=1 // loop_exit
      _
    %359 = vsyncpa [#allocation3], 1
    %s360 = scalar_lea.sflag [#allocation3], 1
    %361 = vsyncpa %s360, 1

</llo_original>
